<compile_context>
chip_gen: v7x
topology: tpu7x:2x2x1
jax: 0.10.0
libtpu: 0.0.40
codegen_flags: <defaults>
</compile_context>

<pallas_src>
import jax
import jax.numpy as jnp
from jax.experimental import pallas as pl
from jax.experimental.pallas import tpu as pltpu


def _round_up(a: int, b: int) -> int:
    return (a + b - 1) // b * b


def moe_router_kernel(x_ref, w_ref, b_ref, idx_ref):
    # logits[e, t] = sum_d W[e, d] * x[t, d] + b[e]   (MXU, f32 accumulate)
    # Contract the last dim of both operands -> result lands directly in the
    # (E, TN) expert-on-sublane / token-on-lane layout (no transpose of the
    # big x tile; same form as flash-attention's bqd,bkd->bqk).
    logits = jax.lax.dot_general(
        w_ref[...], x_ref[...],
        dimension_numbers=(((1,), (1,)), ((), ())),
        preferred_element_type=jnp.float32,
    ) + b_ref[...]                                           # (E, TN)

    num_experts = logits.shape[0]
    expert_iota = jax.lax.broadcasted_iota(jnp.int32, logits.shape, 0)

    # Softmax is strictly monotone per token -> rank the logits directly.
    # Ties resolve to the lowest expert index (matches jax.lax.top_k).
    max1 = jnp.max(logits, axis=0, keepdims=True)                        # (1, TN)
    idx1 = jnp.min(jnp.where(logits == max1, expert_iota, num_experts),
                   axis=0, keepdims=True)                                # (1, TN)

    masked = jnp.where(expert_iota == idx1, -jnp.inf, logits)
    max2 = jnp.max(masked, axis=0, keepdims=True)
    idx2 = jnp.min(jnp.where(masked == max2, expert_iota, num_experts),
                   axis=0, keepdims=True)                                # (1, TN)

    # Write the two rows directly (no sublane concat/copy in the epilogue).
    idx_ref[0:1, :] = idx1.astype(jnp.int32)
    idx_ref[1:2, :] = idx2.astype(jnp.int32)


def moe_router(x, w, b):
    """x: [..., D] float32; w: [E, D] (torch layout); b: [E].

    Returns int32 top-2 expert indices of shape [..., 2].
    """
    lead = x.shape[:-1]
    d = x.shape[-1]
    e = w.shape[0]

    x2d = x.reshape(-1, d)
    n = max(x2d.shape[0], 1)
    b2d = b.reshape(e, 1)

    # --- VMEM budget / tile sizing (generation aware) -----------------------
    try:
        vmem_cap = int(pltpu.get_tpu_info().vmem_capacity_bytes)  # 64 MiB v7x, 128 MiB v5e/v6e
    except Exception:
        vmem_cap = 64 * 1024 * 1024
    vmem_limit = int(min(0.75 * vmem_cap, 100 * 1024 * 1024))
    vmem_limit = max(vmem_limit, 32 * 1024 * 1024)

    # The x double-buffer gets ~75% of the limit (W/b/output are only KBs).
    row_bytes = d * x2d.dtype.itemsize
    x_budget = (vmem_limit * 3) // 4
    tn_cap = max(128, (x_budget // (2 * row_bytes)) // 128 * 128)
    tn = min(4096, tn_cap)

    if n <= tn:
        # Single tile: shrink it to the token count (sublane-aligned), no
        # masking anywhere, no padding of x.
        tn = _round_up(n, 8)
        steps = 1
    else:
        steps = -(-n // tn)  # cdiv
        # v7x megacore: keep the parallel token axis an even number of steps so
        # both TensorCores get equal work.  Shrinking TN only (never grows).
        if steps % 2 == 1:
            tn_even = max(128, _round_up(-(-n // (steps + 1)), 128))
            tn = min(tn, tn_even)
            steps = -(-n // tn)

    grid = (steps,)
    n_out = steps * tn  # output sized so its (2, TN) blocks are never partial

    out_t = pl.pallas_call(
        moe_router_kernel,
        out_shape=jax.ShapeDtypeStruct((2, n_out), jnp.int32),
        grid=grid,
        in_specs=[
            pl.BlockSpec((tn, d), lambda i: (i, 0)),   # x: streamed, double-buffered,
                                                       #    ragged tail handled by Pallas
            pl.BlockSpec((e, d), lambda i: (0, 0)),    # W: resident
            pl.BlockSpec((e, 1), lambda i: (0, 0)),    # b: resident
        ],
        out_specs=pl.BlockSpec((2, tn), lambda i: (0, i)),  # lane-dense output
        compiler_params=pltpu.CompilerParams(
            dimension_semantics=("parallel",),         # v7x: shard tokens over 2 TCs
            vmem_limit_bytes=vmem_limit,
        ),
    )(x2d, w, b2d)

    idx = out_t[:, :n].T                # (N, 2); cheap transpose of a tiny int32 array
    return idx.reshape(*lead, 2)


if __name__ == "__main__":
    # Small shapes consistent with the module: tokens with hidden dim -> experts.
    batch, seq, input_dim, num_experts = 2, 8, 32, 8

    key = jax.random.PRNGKey(0)
    kx, kw, kb = jax.random.split(key, 3)

    # Deterministic init mimicking nn.Linear: U(-1/sqrt(D), 1/sqrt(D)).
    bound = 1.0 / (input_dim ** 0.5)
    gate_w = jax.random.uniform(kw, (num_experts, input_dim),
                                minval=-bound, maxval=bound, dtype=jnp.float32)
    gate_b = jax.random.uniform(kb, (num_experts,),
                                minval=-bound, maxval=bound, dtype=jnp.float32)

    x = jax.random.normal(kx, (batch, seq, input_dim), dtype=jnp.float32)

    topk_indices = moe_router(x, gate_w, gate_b)
    jax.block_until_ready(topk_indices)

    # Reference check in plain JAX (same semantics as the torch module).
    logits = x @ gate_w.T + gate_b
    probs = jax.nn.softmax(logits, axis=-1)
    _, ref_idx = jax.lax.top_k(probs, 2)
    assert topk_indices.shape == (batch, seq, 2)
    assert jnp.array_equal(topk_indices, ref_idx.astype(jnp.int32))

    print("KERNEL_OK")
</pallas_src>

<mosaic_0001>
module attributes {stable_mosaic.version = 11 : i64} {
  func.func @moe_router_kernel(%arg0: i32, %arg1: memref<16x32xf32, #tpu.memory_space<vmem>>, %arg2: memref<8x32xf32, #tpu.memory_space<vmem>>, %arg3: memref<8x1xf32, #tpu.memory_space<vmem>>, %arg4: memref<2x16xi32, #tpu.memory_space<vmem>>) attributes {dimension_semantics = [#tpu.dimension_semantics<parallel>], iteration_bounds = array<i64: 1>, scalar_prefetch = 0 : i64, scratch_operands = 0 : i64, tpu.core_type = #tpu.core_type<tc>, window_params = [{transform_indices = @transform_0, window_bounds = array<i64: 16, 32>}, {pipeline_mode = #tpu.pipeline_mode<synchronous>, transform_indices = @transform_1, window_bounds = array<i64: 8, 32>}, {pipeline_mode = #tpu.pipeline_mode<synchronous>, transform_indices = @transform_2, window_bounds = array<i64: 8, 1>}, {transform_indices = @transform_3, window_bounds = array<i64: 2, 16>}]} {
    %c0 = arith.constant 0 : index
    %c0_0 = arith.constant 0 : index
    %0 = vector.load %arg2[%c0, %c0_0] : memref<8x32xf32, #tpu.memory_space<vmem>>, vector<8x32xf32>
    %c0_1 = arith.constant 0 : index
    %c0_2 = arith.constant 0 : index
    %1 = vector.load %arg1[%c0_1, %c0_2] : memref<16x32xf32, #tpu.memory_space<vmem>>, vector<16x32xf32>
    %cst = arith.constant dense<0.000000e+00> : vector<8x16xf32>
    %2 = tpu.matmul %0, %1, %cst {dimension_numbers = #tpu.dot_dimension_numbers<[1], [1], [0], [0], [0, 0, 1, 0], [], []>} : vector<8x32xf32>, vector<16x32xf32>, vector<8x16xf32> -> vector<8x16xf32>
    %c0_3 = arith.constant 0 : index
    %c0_4 = arith.constant 0 : index
    %3 = vector.load %arg3[%c0_3, %c0_4] : memref<8x1xf32, #tpu.memory_space<vmem>>, vector<8x1xf32>
    %4 = vector.broadcast %3 : vector<8x1xf32> to vector<8x16xf32>
    %5 = arith.addf %2, %4 : vector<8x16xf32>
    %6 = tpu.iota {dimensions = array<i32: 0>} : vector<8x16xi32>
    %cst_5 = arith.constant dense<0xFF800000> : vector<16xf32>
    %7 = vector.multi_reduction <maximumf>, %5, %cst_5 [0] : vector<8x16xf32> to vector<16xf32>
    %8 = vector.shape_cast %7 : vector<16xf32> to vector<1x16xf32>
    %9 = vector.broadcast %8 : vector<1x16xf32> to vector<8x16xf32>
    %10 = arith.cmpf oeq, %5, %9 : vector<8x16xf32>
    %c8_i32 = arith.constant 8 : i32
    %11 = vector.broadcast %c8_i32 : i32 to vector<8x16xi32>
    %12 = arith.select %10, %6, %11 : vector<8x16xi1>, vector<8x16xi32>
    %cst_6 = arith.constant dense<2147483647> : vector<16xi32>
    %13 = vector.multi_reduction <minsi>, %12, %cst_6 [0] : vector<8x16xi32> to vector<16xi32>
    %14 = vector.shape_cast %13 : vector<16xi32> to vector<1x16xi32>
    %15 = vector.broadcast %14 : vector<1x16xi32> to vector<8x16xi32>
    %16 = arith.cmpi eq, %6, %15 : vector<8x16xi32>
    %cst_7 = arith.constant 0xFF800000 : f32
    %17 = vector.broadcast %cst_7 : f32 to vector<8x16xf32>
    %18 = arith.select %16, %17, %5 : vector<8x16xi1>, vector<8x16xf32>
    %cst_8 = arith.constant dense<0xFF800000> : vector<16xf32>
    %19 = vector.multi_reduction <maximumf>, %18, %cst_8 [0] : vector<8x16xf32> to vector<16xf32>
    %20 = vector.shape_cast %19 : vector<16xf32> to vector<1x16xf32>
    %21 = vector.broadcast %20 : vector<1x16xf32> to vector<8x16xf32>
    %22 = arith.cmpf oeq, %18, %21 : vector<8x16xf32>
    %c8_i32_9 = arith.constant 8 : i32
    %23 = vector.broadcast %c8_i32_9 : i32 to vector<8x16xi32>
    %24 = arith.select %22, %6, %23 : vector<8x16xi1>, vector<8x16xi32>
    %cst_10 = arith.constant dense<2147483647> : vector<16xi32>
    %25 = vector.multi_reduction <minsi>, %24, %cst_10 [0] : vector<8x16xi32> to vector<16xi32>
    %26 = vector.shape_cast %25 : vector<16xi32> to vector<1x16xi32>
    %c0_11 = arith.constant 0 : index
    %c0_12 = arith.constant 0 : index
    %27 = vector.load %arg4[%c0_11, %c0_12] : memref<2x16xi32, #tpu.memory_space<vmem>>, vector<1x16xi32>
    tpu.vector_store %arg4[%c0_11, %c0_12], %14 {strides = array<i32>} : memref<2x16xi32, #tpu.memory_space<vmem>>, vector<1x16xi32>,
    %c1 = arith.constant 1 : index
    %c0_13 = arith.constant 0 : index
    %28 = vector.load %arg4[%c1, %c0_13] : memref<2x16xi32, #tpu.memory_space<vmem>>, vector<1x16xi32>
    tpu.vector_store %arg4[%c1, %c0_13], %26 {strides = array<i32>} : memref<2x16xi32, #tpu.memory_space<vmem>>, vector<1x16xi32>,
    return
  }
  func.func @transform_0(%arg0: i32) -> (i32, i32) {
    %c0_i32 = arith.constant 0 : i32
    %c0_i32_0 = arith.constant 0 : i32
    return %arg0, %c0_i32 : i32, i32
  }
  func.func @transform_1(%arg0: i32) -> (i32, i32) {
    %c0_i32 = arith.constant 0 : i32
    %c0_i32_0 = arith.constant 0 : i32
    %c0_i32_1 = arith.constant 0 : i32
    return %c0_i32, %c0_i32_0 : i32, i32
  }
  func.func @transform_2(%arg0: i32) -> (i32, i32) {
    %c0_i32 = arith.constant 0 : i32
    %c0_i32_0 = arith.constant 0 : i32
    %c0_i32_1 = arith.constant 0 : i32
    return %c0_i32, %c0_i32_0 : i32, i32
  }
  func.func @transform_3(%arg0: i32) -> (i32, i32) {
    %c0_i32 = arith.constant 0 : i32
    %c0_i32_0 = arith.constant 0 : i32
    return %c0_i32, %arg0 : i32, i32
  }
}

</mosaic_0001>

<llo_original>
// kernel: tpu_custom_call.1
$region0: #{tpu_custom_call.1}
  #allocation0 [shape = 'u32[]', space=smem, size = 0x4, offset = 0x4, fixed_abs, tag = 'smem constant byte address 0x4 - core index']
  #allocation1 [shape = 'u32[144,128]{1,0:T(1,128)}', space=vmem, size = 0x12000, scoped, tag = 'internal scratch']
  %s0 = inlined_call_operand.hbm [shape: f32[16,32], index: 0, kind: input, shape index: {}]
  %s1 = inlined_call_operand.vmem [shape: f32[8,32], index: 1, kind: input, shape index: {}]
  %s2 = inlined_call_operand.vmem [shape: f32[8,1], index: 2, kind: input, shape index: {}]
  %s3 = inlined_call_operand.hbm [shape: s32[2,16], index: 3, kind: output, shape index: {}]
  %s4 = sld [smem:[#allocation0]]
  $region26: #{tpu_custom_call.1} parent=0
    _
  %s6 = ssub.s32 1, %s4
  %s7 = scalar_select 0, %s6, %s4
  $region1: #{tpu_custom_call.1} parent=0
    #allocation2 [shape = 'u8[8192]{0}', space=vmem, size = 0x2000, scoped, tag = 'input window, operand 0, single buffered']
    #allocation3 [shape = 's32[1]{0}', space=sflag, size = 0x4, scoped, tag = 'scoped memory for tpu_custom_call.1']
    #allocation4 [shape = 's32[1]{0}', space=sflag, size = 0x4, scoped, tag = 'scoped memory for tpu_custom_call.1']
    #allocation5 [shape = 'u8[1024]{0}', space=vmem, size = 0x400, scoped, tag = 'output window, operand 0, single buffered']
    %8 = vsyncpa [#allocation3], 0
    %9 = vsyncpa [#allocation4], 0
    // Predicated region
    $region2: #{tpu_custom_call.1} parent=1 // pred_check
      _
    $region3: #{tpu_custom_call.1} parent=1 // pred_check_branch
      %11 = sbr.rel (0) target = $region5
    $region4: #{tpu_custom_call.1} parent=1 // pred_region
      %s13 = ssub.s32 256, 256
      %14 = vsyncadd [#allocation3], %s13
      %s15 = sshll.u32 [#allocation2], 4
      %s16 = int_to_ptr.vmem [resolvable:$true] %s15
      %21 = dma.hbm_to_vmem [thread:$0]  %s0, 256, %s16, [#allocation3], 128, 128, 8
    $region5: #{tpu_custom_call.1} parent=1 // pred_fallthru
      _
    // Predicated region
    $region6: #{tpu_custom_call.1} parent=1 // pred_check
      _
    $region7: #{tpu_custom_call.1} parent=1 // pred_check_branch
      %23 = sbr.rel (0) target = $region9
    $region8: #{tpu_custom_call.1} parent=1 // pred_region
      _
    $region9: #{tpu_custom_call.1} parent=1 // pred_fallthru
      _
    // Predicated region
    $region10: #{tpu_custom_call.1} parent=1 // pred_check
      _
    $region11: #{tpu_custom_call.1} parent=1 // pred_check_branch
      %25 = sbr.rel (0) target = $region13
    $region12: #{tpu_custom_call.1} parent=1 // pred_region
      _
    $region13: #{tpu_custom_call.1} parent=1 // pred_fallthru
      _
    // Predicated region
    $region14: #{tpu_custom_call.1} parent=1 // pred_check
      _
    $region15: #{tpu_custom_call.1} parent=1 // pred_check_branch
      %27 = sbr.rel (0) target = $region17
    $region16: #{tpu_custom_call.1} parent=1 // pred_region
      %28 = dma.done [#allocation3], 256
    $region17: #{tpu_custom_call.1} parent=1 // pred_fallthru
      _
    %v29 = vld [vmem:[%s1] sm:$0xff]
    %v30 = vld [vmem:[#allocation2] sm:$0xff]
    %v31 = vld [vmem:[#allocation2 + $0x8] sm:$0xff]
    %v32 = vld [vmem:[%s2] sm:$0xff]
    %34 = vset.pattern.permute.xlu0 0
    %35 = vperm.xlu0 %34, %v32
    %v36 = vpop.permute.xlu0 %35
    %vm38 = vcmask 261120
    %v40 = vsel %vm38, %v29, 0
    %v43 = vsel %vm38, %v30, 0
    %v46 = vsel %vm38, %v31, 0
    %48 = vmatprep.subr.mxu0 0.0
    %49 = vmatpush1.xpose.msra.mxu0 %v43
    %50 = vmatprep.subr.mxu0 0.0
    %51 = vmatpush1.xpose.msra.mxu0 %v46
    %52 = vmatprep.subr.mxu0 0.0
    %53 = vmatpush1.xpose.msra.mxu0 0.0
    %54 = vmatprep.subr.mxu0 0.0
    %55 = vmatpush1.xpose.msra.mxu0 0.0
    %56 = vmatprep.subr.mxu0 0.0
    %57 = vmatpush1.xpose.msra.mxu0 0.0
    %58 = vmatprep.subr.mxu0 0.0
    %59 = vmatpush1.xpose.msra.mxu0 0.0
    %60 = vmatprep.subr.mxu0 0.0
    %61 = vmatpush1.xpose.msra.mxu0 0.0
    %62 = vmatprep.subr.mxu0 0.0
    %63 = vmatpush1.xpose.msra.mxu0 0.0
    %64 = vmatprep.subr.mxu0 0.0
    %65 = vmatpush1.xpose.msra.mxu0 0.0
    %66 = vmatprep.subr.mxu0 0.0
    %67 = vmatpush1.xpose.msra.mxu0 0.0
    %68 = vmatprep.subr.mxu0 0.0
    %69 = vmatpush1.xpose.msra.mxu0 0.0
    %70 = vmatprep.subr.mxu0 0.0
    %71 = vmatpush1.xpose.msra.mxu0 0.0
    %72 = vmatprep.subr.mxu0 0.0
    %73 = vmatpush1.xpose.msra.mxu0 0.0
    %74 = vmatprep.subr.mxu0 0.0
    %75 = vmatpush1.xpose.msra.mxu0 0.0
    %76 = vmatprep.subr.mxu0 0.0
    %77 = vmatpush1.xpose.msra.mxu0 0.0
    %78 = vmatprep.subr.mxu0 0.0
    %79 = vmatpush1.xpose.msra.mxu0 0.0
    %80 = vmatprep.subr.mxu0 0.0
    %81 = vmatpush1.xpose.msra.mxu0 0.0
    %82 = vmatprep.subr.mxu0 0.0
    %83 = vmatpush1.xpose.msra.mxu0 0.0
    %84 = vmatprep.subr.mxu0 0.0
    %85 = vmatpush1.xpose.msra.mxu0 0.0
    %86 = vmatprep.subr.mxu0 0.0
    %87 = vmatpush1.xpose.msra.mxu0 0.0
    %88 = vmatprep.subr.mxu0 0.0
    %89 = vmatpush1.xpose.msra.mxu0 0.0
    %90 = vmatprep.subr.mxu0 0.0
    %91 = vmatpush1.xpose.msra.mxu0 0.0
    %92 = vmatprep.subr.mxu0 0.0
    %93 = vmatpush1.xpose.msra.mxu0 0.0
    %94 = vmatprep.subr.mxu0 0.0
    %95 = vmatpush1.xpose.msra.mxu0 0.0
    %96 = vmatprep.subr.mxu0 0.0
    %97 = vmatpush1.xpose.msra.mxu0 0.0
    %98 = vmatprep.subr.mxu0 0.0
    %99 = vmatpush1.xpose.msra.mxu0 0.0
    %100 = vmatprep.subr.mxu0 0.0
    %101 = vmatpush1.xpose.msra.mxu0 0.0
    %102 = vmatprep.subr.mxu0 0.0
    %103 = vmatpush1.xpose.msra.mxu0 0.0
    %104 = vmatprep.subr.mxu0 0.0
    %105 = vmatpush1.xpose.msra.mxu0 0.0
    %106 = vmatprep.subr.mxu0 0.0
    %107 = vmatpush1.xpose.msra.mxu0 0.0
    %108 = vmatprep.subr.mxu0 0.0
    %109 = vmatpush1.xpose.msra.mxu0 0.0
    %110 = vmatprep.subr.mxu0 0.0
    %111 = vmatpush1.xpose.msra.mxu0 0.0
    %112 = vmatprep.mubr.f32.mxu0 0.0
    %113 = vmatmul.mubr.f32.gmra.mrb[0].mxu0 %v40
    %v114 = vpop.f32.mrb[0].mxu0
    %v115 = vadd.f32 %v36, %v114
    %v116 = vpop.f32.mrb[0].mxu0
    %117 = vdwg.mxu0
    %v118 = vlaneseq
    %v119 = vshrl.u32 %v118, 7
    %vm120 = vcmask 130048
    %v121 = vsel %vm120, %v115, -inf
    %v122 = vrot.slane %v121, 4
    %v123 = vmax.f32 %v121, %v122
    %v124 = vrot.slane %v123, 2
    %v125 = vmax.f32 %v123, %v124
    %v126 = vrot.slane %v125, 1
    %v127 = vmax.f32 %v125, %v126
    %vm128 = vcmp.eq.f32.partialorder %v115, %v127
    %v129 = vsel %vm128, %v119, 8
    %v130 = vsel %vm120, %v129, 2147483647
    %v131 = vrot.slane %v130, 4
    %vm132 = vcmp.lt.s32.totalorder %v130, %v131
    %v133 = vsel %vm132, %v130, %v131
    %v134 = vrot.slane %v133, 2
    %vm135 = vcmp.lt.s32.totalorder %v133, %v134
    %v136 = vsel %vm135, %v133, %v134
    %v137 = vrot.slane %v136, 1
    %vm138 = vcmp.lt.s32.totalorder %v136, %v137
    %v139 = vsel %vm138, %v136, %v137
    %vm140 = vcmp.eq.s32.totalorder %v119, %v139
    %v141 = vsel %vm140, -inf, %v115
    %v142 = vsel %vm120, %v141, -inf
    %v143 = vrot.slane %v142, 4
    %v144 = vmax.f32 %v142, %v143
    %v145 = vrot.slane %v144, 2
    %v146 = vmax.f32 %v144, %v145
    %v147 = vrot.slane %v146, 1
    %v148 = vmax.f32 %v146, %v147
    %vm149 = vcmp.eq.f32.partialorder %v141, %v148
    %v150 = vsel %vm149, %v119, 8
    %v151 = vsel %vm120, %v150, 2147483647
    %v152 = vrot.slane %v151, 4
    %vm153 = vcmp.lt.s32.totalorder %v151, %v152
    %v154 = vsel %vm153, %v151, %v152
    %v155 = vrot.slane %v154, 2
    %vm156 = vcmp.lt.s32.totalorder %v154, %v155
    %v157 = vsel %vm156, %v154, %v155
    %v158 = vrot.slane %v157, 1
    %vm159 = vcmp.lt.s32.totalorder %v157, %v158
    %v160 = vsel %vm159, %v157, %v158
    %vm161 = vcmask 122880
    %162 = vst.msk [vmem:[#allocation5] sm:$0x1] %vm161, %v139
    %163 = vst.msk [vmem:[#allocation5 + $0x1] sm:$0x1] %vm161, %v160
    // Predicated region
    $region18: #{tpu_custom_call.1} parent=1 // pred_check
      _
    $region19: #{tpu_custom_call.1} parent=1 // pred_check_branch
      %165 = sbr.rel (0) target = $region21
    $region20: #{tpu_custom_call.1} parent=1 // pred_region
      %s167 = ssub.s32 32, 32
      %168 = vsyncadd [#allocation4], %s167
      %s170 = sshll.u32 [#allocation5], 4
      %s171 = int_to_ptr.vmem [resolvable:$true] %s170
      %173 = dma.vmem_to_hbm [thread:$0]  %s171, 32, %s3, [#allocation4]
    $region21: #{tpu_custom_call.1} parent=1 // pred_fallthru
      _
    // Predicated region
    $region22: #{tpu_custom_call.1} parent=1 // pred_check
      _
    $region23: #{tpu_custom_call.1} parent=1 // pred_check_branch
      %175 = sbr.rel (0) target = $region25
    $region24: #{tpu_custom_call.1} parent=1 // pred_region
      %176 = dma.done [#allocation4], 32
    $region25: #{tpu_custom_call.1} parent=1 // pred_fallthru
      _
    %177 = vsyncpa [#allocation3], 1
    %178 = vsyncpa [#allocation4], 1

</llo_original>
